<compile_context>
chip_gen: v6e
topology: v6e:2x2x1
jax: 0.10.0
libtpu: 0.0.40
codegen_flags: <defaults>
</compile_context>

<pallas_src>
import math

import jax
import jax.numpy as jnp
from jax.experimental import pallas as pl
from jax.experimental.pallas import tpu as pltpu


def _vmem_limit_bytes():
    """Scoped-VMEM budget derived from the chip (v5e/v6e: 128 MiB, v7x: 64 MiB)."""
    cap = 64 * 1024 * 1024
    try:
        cap = int(pltpu.get_tpu_info().vmem_capacity_bytes)
    except Exception:
        pass
    return min((cap * 3) // 4, 100 * 1024 * 1024)


_VMEM_LIMIT = _vmem_limit_bytes()
_LARGE_VMEM = _VMEM_LIMIT > 64 * 1024 * 1024        # v5e / v6e -> bigger tiles


def _tile(dim, target, aligns):
    """Largest block <= target that divides `dim` with the best available alignment.
    Falls back to the full dim (always a legal block shape)."""
    if dim <= target:
        return dim
    for align in aligns:
        if dim % align:
            continue
        t = (target // align) * align
        while t >= align:
            if dim % t == 0:
                return t
            t -= align
    return dim


# ---------------------------------------------------------------------------
# Kernel 1: tiled linear layer   y = x @ W_t + b   (x, W_t bf16; f32 accumulation)
# ---------------------------------------------------------------------------
def _linear_kernel(x_ref, w_ref, b_ref, o_ref, acc_ref):
    kk = pl.program_id(2)

    @pl.when(kk == 0)
    def _():
        acc_ref[...] = jnp.zeros_like(acc_ref)

    acc_ref[...] += jnp.dot(x_ref[...], w_ref[...],
                            preferred_element_type=jnp.float32)

    @pl.when(kk == pl.num_programs(2) - 1)
    def _():
        o_ref[...] = (acc_ref[...] + b_ref[...]).astype(o_ref.dtype)


def linear(x, w_t, b, out_dtype=jnp.float32):
    M, K = x.shape
    _, Nout = w_t.shape
    tgt = 512 if _LARGE_VMEM else 256
    tm = _tile(M, tgt, (16, 8))            # bf16 rows pack 16 per sublane group
    tk = _tile(K, 2 * tgt, (256, 128))     # prefer 256-aligned K/N for v6e/v7x MXU
    tn = _tile(Nout, tgt, (256, 128))
    grid = (M // tm, Nout // tn, K // tk)
    return pl.pallas_call(
        _linear_kernel,
        out_shape=jax.ShapeDtypeStruct((M, Nout), out_dtype),
        grid=grid,
        in_specs=[
            pl.BlockSpec((tm, tk), lambda i, j, k: (i, k)),
            pl.BlockSpec((tk, tn), lambda i, j, k: (k, j)),
            pl.BlockSpec((1, tn), lambda i, j, k: (0, j)),
        ],
        out_specs=pl.BlockSpec((tm, tn), lambda i, j, k: (i, j)),
        scratch_shapes=[pltpu.VMEM((tm, tn), jnp.float32)],
        compiler_params=pltpu.CompilerParams(
            dimension_semantics=("parallel", "parallel", "arbitrary"),
            vmem_limit_bytes=_VMEM_LIMIT),
    )(x, w_t, b.reshape(1, Nout))


# ---------------------------------------------------------------------------
# Kernel 2: flash-style attention core (factorized weight_type==1 reweighting).
#   scores = (q @ k^T) * (sin_i*sin_j + cos_i*cos_j) * (1/sqrt(D))
#   online softmax over the S (kv) grid axis; bf16 output; optional LSE.
# ---------------------------------------------------------------------------
def _flash_step(q_ref, k_ref, v_ref, wq_ref, wk_ref, o_ref, lse_ref,
                m_sc, l_sc, acc_sc):
    s_idx = pl.program_id(2)

    @pl.when(s_idx == 0)
    def _():
        m_sc[...] = jnp.full_like(m_sc, -jnp.inf)
        l_sc[...] = jnp.zeros_like(l_sc)
        acc_sc[...] = jnp.zeros_like(acc_sc)

    # plain D-wide contraction on the MXU (bf16 operands, f32 accumulation)
    s = jnp.einsum("hld,hsd->hls", q_ref[...], k_ref[...],
                   preferred_element_type=jnp.float32)           # (H, Lt, St)

    # factorized sin/cos reweighting (scaling folded into wq), applied in f32 on VPU
    wq = wq_ref[...]                                             # (Lt, 2): [sin*scale, cos*scale]
    wk = wk_ref[...]                                             # (2, St): [sin; cos]
    rw = wq[:, 0:1] * wk[0:1, :] + wq[:, 1:2] * wk[1:2, :]       # (Lt, St)
    s = s * rw                                                   # broadcast over heads

    m_prev = m_sc[...]
    m_new = jnp.maximum(m_prev, jnp.max(s, axis=-1, keepdims=True))
    alpha = jnp.exp(m_prev - m_new)
    p = jnp.exp(s - m_new)
    l_sc[...] = alpha * l_sc[...] + jnp.sum(p, axis=-1, keepdims=True)
    acc_sc[...] = alpha * acc_sc[...] + jnp.einsum(
        "hls,hsd->hld", p.astype(jnp.bfloat16), v_ref[...],
        preferred_element_type=jnp.float32)
    m_sc[...] = m_new

    @pl.when(s_idx == pl.num_programs(2) - 1)
    def _():
        inv = pl.reciprocal(l_sc[...], approx=True)
        o_ref[...] = (acc_sc[...] * inv).astype(o_ref.dtype)
        if lse_ref is not None:
            lse_ref[...] = m_sc[...] + jnp.log(l_sc[...])


def _flash_kernel_lse(q_ref, k_ref, v_ref, wq_ref, wk_ref, o_ref, lse_ref,
                      m_sc, l_sc, acc_sc):
    _flash_step(q_ref, k_ref, v_ref, wq_ref, wk_ref, o_ref, lse_ref,
                m_sc, l_sc, acc_sc)


def _flash_kernel(q_ref, k_ref, v_ref, wq_ref, wk_ref, o_ref,
                  m_sc, l_sc, acc_sc):
    _flash_step(q_ref, k_ref, v_ref, wq_ref, wk_ref, o_ref, None,
                m_sc, l_sc, acc_sc)


def _flash_tiles(BH, L, S, D):
    h_blk = _tile(BH, 8, (1,))
    l_tile = _tile(L, 512 if _LARGE_VMEM else 256, (16, 8))
    s_tile = _tile(S, 1024 if _LARGE_VMEM else 512, (256, 128))

    def footprint(h, lt, st):
        blocks = 2 * 2 * (h * lt * D + 2 * h * st * D)   # bf16 q/k/v blocks, double-buffered
        blocks += 2 * 2 * h * lt * D                     # bf16 out block, double-buffered
        inter = 3 * 4 * h * lt * st                      # f32 score/prob live intermediates
        scratch = 4 * h * lt * (D + 2 * 128)             # acc + lane-padded m/l scratch
        return blocks + inter + scratch

    # Shrink heads-per-step first (keeps MXU M/N dims large), then the kv tile.
    while footprint(h_blk, l_tile, s_tile) > _VMEM_LIMIT and h_blk % 2 == 0:
        h_blk //= 2
    while footprint(h_blk, l_tile, s_tile) > _VMEM_LIMIT and s_tile % 256 == 0:
        s_tile //= 2
    return h_blk, l_tile, s_tile


def flash_attention(q, k, v, wq, wk, *, h_blk, l_tile, s_tile, return_lse):
    BH, L, D = q.shape
    S = k.shape[1]
    grid = (BH // h_blk, L // l_tile, S // s_tile)
    in_specs = [
        pl.BlockSpec((h_blk, l_tile, D), lambda b, l, s: (b, l, 0)),
        pl.BlockSpec((h_blk, s_tile, D), lambda b, l, s: (b, s, 0)),
        pl.BlockSpec((h_blk, s_tile, D), lambda b, l, s: (b, s, 0)),
        pl.BlockSpec((l_tile, 2), lambda b, l, s: (l, 0)),
        pl.BlockSpec((2, s_tile), lambda b, l, s: (0, s)),
    ]
    scratch = [
        pltpu.VMEM((h_blk, l_tile, 1), jnp.float32),   # running max
        pltpu.VMEM((h_blk, l_tile, 1), jnp.float32),   # running sum
        pltpu.VMEM((h_blk, l_tile, D), jnp.float32),   # output accumulator
    ]
    cp = pltpu.CompilerParams(
        dimension_semantics=("parallel", "parallel", "arbitrary"),
        vmem_limit_bytes=_VMEM_LIMIT)
    if return_lse:
        kernel = _flash_kernel_lse
        out_shape = (jax.ShapeDtypeStruct((BH, L, D), jnp.bfloat16),
                     jax.ShapeDtypeStruct((BH, L, 1), jnp.float32))
        out_specs = (pl.BlockSpec((h_blk, l_tile, D), lambda b, l, s: (b, l, 0)),
                     pl.BlockSpec((h_blk, l_tile, 1), lambda b, l, s: (b, l, 0)))
    else:
        kernel = _flash_kernel
        out_shape = jax.ShapeDtypeStruct((BH, L, D), jnp.bfloat16)
        out_specs = pl.BlockSpec((h_blk, l_tile, D), lambda b, l, s: (b, l, 0))
    return pl.pallas_call(
        kernel, out_shape=out_shape, grid=grid,
        in_specs=in_specs, out_specs=out_specs, scratch_shapes=scratch,
        compiler_params=cp,
    )(q, k, v, wq, wk)


# ---------------------------------------------------------------------------
# Kernel 3: attention probabilities (only for need_weights=True).
#   p = exp(score - lse), stored bf16 to halve HBM writeback.
# ---------------------------------------------------------------------------
def _probs_kernel(q_ref, k_ref, wq_ref, wk_ref, lse_ref, p_ref):
    s = jnp.einsum("hld,hsd->hls", q_ref[...], k_ref[...],
                   preferred_element_type=jnp.float32)
    wq = wq_ref[...]
    wk = wk_ref[...]
    rw = wq[:, 0:1] * wk[0:1, :] + wq[:, 1:2] * wk[1:2, :]
    s = s * rw
    p_ref[...] = jnp.exp(s - lse_ref[...]).astype(p_ref.dtype)


def attention_probs(q, k, wq, wk, lse, *, h_blk, l_tile, s_tile):
    BH, L, D = q.shape
    S = k.shape[1]
    grid = (BH // h_blk, L // l_tile, S // s_tile)
    return pl.pallas_call(
        _probs_kernel,
        out_shape=jax.ShapeDtypeStruct((BH, L, S), jnp.bfloat16),
        grid=grid,
        in_specs=[
            pl.BlockSpec((h_blk, l_tile, D), lambda b, l, s: (b, l, 0)),
            pl.BlockSpec((h_blk, s_tile, D), lambda b, l, s: (b, s, 0)),
            pl.BlockSpec((l_tile, 2), lambda b, l, s: (l, 0)),
            pl.BlockSpec((2, s_tile), lambda b, l, s: (0, s)),
            pl.BlockSpec((h_blk, l_tile, 1), lambda b, l, s: (b, l, 0)),
        ],
        out_specs=pl.BlockSpec((h_blk, l_tile, s_tile), lambda b, l, s: (b, l, s)),
        compiler_params=pltpu.CompilerParams(
            dimension_semantics=("parallel", "parallel", "parallel"),
            vmem_limit_bytes=_VMEM_LIMIT),
    )(q, k, wq, wk, lse)


# ---------------------------------------------------------------------------
# Module wrapper
# ---------------------------------------------------------------------------
class MultiheadAttentionPlusPallas:
    def __init__(self, embed_dim, num_heads, key):
        self.embed_dim = embed_dim
        self.num_heads = num_heads
        self.head_dim = embed_dim // num_heads
        assert self.head_dim * num_heads == embed_dim

        ks = jax.random.split(key, 8)

        def xavier(k, shape, gain=1.0):
            fan_out, fan_in = shape
            a = gain * math.sqrt(6.0 / (fan_in + fan_out))
            return jax.random.uniform(k, shape, jnp.float32, -a, a)

        g = 1.0 / math.sqrt(2.0)   # qkv_same_dim init
        # f32 master weights (nn.Linear layout (out, in)) — used by the reference
        self.q_w = xavier(ks[0], (embed_dim, embed_dim), g)
        self.k_w = xavier(ks[1], (embed_dim, embed_dim), g)
        self.v_w = xavier(ks[2], (embed_dim, embed_dim), g)
        self.o_w = xavier(ks[3], (embed_dim, embed_dim), 1.0)
        self.q_b = jax.random.normal(ks[4], (embed_dim,), jnp.float32) * 0.02
        self.k_b = jax.random.normal(ks[5], (embed_dim,), jnp.float32) * 0.02
        self.v_b = jax.random.normal(ks[6], (embed_dim,), jnp.float32) * 0.02
        self.o_b = jnp.zeros((embed_dim,), jnp.float32)   # init.constant_(0)

        # kernel-side weights: pre-transposed to (in, out) and cast to bf16 once,
        # with q/k/v (and k/v) fused so the input is read from HBM only once.
        bf = jnp.bfloat16
        self.qkv_wt = jnp.concatenate(
            [self.q_w.T, self.k_w.T, self.v_w.T], axis=1).astype(bf)      # (E, 3E)
        self.qkv_b = jnp.concatenate([self.q_b, self.k_b, self.v_b])
        self.kv_wt = jnp.concatenate([self.k_w.T, self.v_w.T], axis=1).astype(bf)
        self.kv_b = jnp.concatenate([self.k_b, self.v_b])
        self.q_wt = self.q_w.T.astype(bf)
        self.k_wt = self.k_w.T.astype(bf)
        self.v_wt = self.v_w.T.astype(bf)
        self.o_wt = self.o_w.T.astype(bf)

    def __call__(self, query, key, value, need_weights=True):
        # query: (L, N, E), key/value: (S, N, E)
        L, N, E = query.shape
        S = key.shape[0]
        H, D = self.num_heads, self.head_dim
        bf = jnp.bfloat16

        # ---- projections (bf16 activations pre-cast once; kernels see bf16) ----
        q_in = query.reshape(L * N, E).astype(bf)
        if (query is key) and (key is value):          # self-attention: fused QKV
            qkv = linear(q_in, self.qkv_wt, self.qkv_b, out_dtype=bf)
            q, k, v = qkv[:, :E], qkv[:, E:2 * E], qkv[:, 2 * E:]
        elif key is value:                             # enc-dec attention: fused KV
            kv_in = key.reshape(S * N, E).astype(bf)
            q = linear(q_in, self.q_wt, self.q_b, out_dtype=bf)
            kv = linear(kv_in, self.kv_wt, self.kv_b, out_dtype=bf)
            k, v = kv[:, :E], kv[:, E:]
        else:
            q = linear(q_in, self.q_wt, self.q_b, bf)
            k = linear(key.reshape(S * N, E).astype(bf), self.k_wt, self.k_b, bf)
            v = linear(value.reshape(S * N, E).astype(bf), self.v_wt, self.v_b, bf)

        # (len, N*H, D) -> (N*H, len, D)   (torch bmm layout), bf16 transposes.
        # TODO(synk): fold these layout changes into the attention BlockSpecs once
        # Mosaic in-kernel major-dim transposes are validated for small head_dim.
        q = q.reshape(L, N * H, D).transpose(1, 0, 2)
        k = k.reshape(S, N * H, D).transpose(1, 0, 2)
        v = v.reshape(S, N * H, D).transpose(1, 0, 2)

        # ---- positional sin/cos tables (hoisted; 1/sqrt(D) scaling folded in) ----
        m = float(max(L, S))
        scaling = float(D) ** (-0.5)
        aq = (math.pi / 2.0) * jnp.arange(1, L + 1, dtype=jnp.float32) / m
        ak = (math.pi / 2.0) * jnp.arange(1, S + 1, dtype=jnp.float32) / m
        wq = jnp.stack([jnp.sin(aq) * scaling, jnp.cos(aq) * scaling], axis=1)  # (L, 2)
        wk = jnp.stack([jnp.sin(ak), jnp.cos(ak)], axis=0)                      # (2, S)

        BH = N * H
        h_blk, l_tile, s_tile = _flash_tiles(BH, L, S, D)

        if need_weights:
            attn, lse = flash_attention(q, k, v, wq, wk,
                                        h_blk=h_blk, l_tile=l_tile, s_tile=s_tile,
                                        return_lse=True)
        else:
            attn = flash_attention(q, k, v, wq, wk,
                                   h_blk=h_blk, l_tile=l_tile, s_tile=s_tile,
                                   return_lse=False)

        # (N*H, L, D) -> (L, N, E) -> out projection (attn is already bf16)
        out_in = attn.transpose(1, 0, 2).reshape(L * N, E)
        out = linear(out_in, self.o_wt, self.o_b).reshape(L, N, E)

        if need_weights:
            probs = attention_probs(q, k, wq, wk, lse,
                                    h_blk=h_blk, l_tile=l_tile, s_tile=s_tile)
            return out, probs.reshape(N, H, L, S)     # bf16 attention weights
        return out, None


# ---------------------------------------------------------------------------
# Plain-JAX f32 reference (mirrors the PyTorch forward, default flags)
# ---------------------------------------------------------------------------
def reference_forward(mod, query, key, value):
    L, N, E = query.shape
    S = key.shape[0]
    H, D = mod.num_heads, mod.head_dim

    q = query.reshape(L * N, E) @ mod.q_w.T + mod.q_b
    k = key.reshape(S * N, E) @ mod.k_w.T + mod.k_b
    v = value.reshape(S * N, E) @ mod.v_w.T + mod.v_b

    q = q.reshape(L, N * H, D).transpose(1, 0, 2) * (D ** -0.5)
    k = k.reshape(S, N * H, D).transpose(1, 0, 2)
    v = v.reshape(S, N * H, D).transpose(1, 0, 2)

    m = max(L, S)
    idx = (math.pi / 2.0) * jnp.arange(1, m + 1, dtype=jnp.float32).reshape(1, -1, 1)
    q2 = jnp.concatenate([q * jnp.sin(idx[:, :L, :] / m), q * jnp.cos(idx[:, :L, :] / m)], -1)
    k2 = jnp.concatenate([k * jnp.sin(idx[:, :S, :] / m), k * jnp.cos(idx[:, :S, :] / m)], -1)

    w = jnp.einsum("bld,bsd->bls", q2, k2)
    w = jax.nn.softmax(w, axis=-1)
    o = jnp.einsum("bls,bsd->bld", w, v)
    o = o.transpose(1, 0, 2).reshape(L, N, E)
    o = o @ mod.o_w.T + mod.o_b
    return o, w.reshape(N, H, L, S)


if __name__ == "__main__":
    E, H = 32, 4         # head_dim = 8
    N = 2

    key = jax.random.PRNGKey(0)
    k_param, k_x, k_q, k_kv = jax.random.split(key, 4)
    mod = MultiheadAttentionPlusPallas(E, H, k_param)

    # Tolerances are loosened vs the f32 reference because the kernels use bf16
    # activations/MXU operands (f32 accumulation) and store attention probs in bf16.
    ATOL = RTOL = 5e-2

    # --- test 1: self-attention (fused QKV path), L == S == 8 ---
    L = S = 8
    x = jax.random.normal(k_x, (L, N, E), jnp.float32)
    out, attn_w = mod(x, x, x)
    out = jax.block_until_ready(out)
    attn_w = jax.block_until_ready(attn_w)
    ref_out, ref_w = reference_forward(mod, x, x, x)
    assert out.shape == (L, N, E)
    assert attn_w.shape == (N, H, L, S)
    assert jnp.allclose(out, ref_out, atol=ATOL, rtol=RTOL)
    assert jnp.allclose(attn_w.astype(jnp.float32), ref_w, atol=ATOL, rtol=RTOL)

    # --- test 2: need_weights=False path (flash kernel only, no lse/probs) ---
    out_nw, w_none = mod(x, x, x, need_weights=False)
    out_nw = jax.block_until_ready(out_nw)
    assert w_none is None
    assert jnp.allclose(out_nw, out, atol=1e-2, rtol=1e-2)
    assert jnp.allclose(out_nw, ref_out, atol=ATOL, rtol=RTOL)

    # --- test 3: encoder-decoder style attention (fused KV path), L != S ---
    Lq, Skv = 8, 16
    qx = jax.random.normal(k_q, (Lq, N, E), jnp.float32)
    kv = jax.random.normal(k_kv, (Skv, N, E), jnp.float32)
    out2, w2 = mod(qx, kv, kv)
    out2 = jax.block_until_ready(out2)
    w2 = jax.block_until_ready(w2)
    ref_out2, ref_w2 = reference_forward(mod, qx, kv, kv)
    assert out2.shape == (Lq, N, E)
    assert w2.shape == (N, H, Lq, Skv)
    assert jnp.allclose(out2, ref_out2, atol=ATOL, rtol=RTOL)
    assert jnp.allclose(w2.astype(jnp.float32), ref_w2, atol=ATOL, rtol=RTOL)

    print("KERNEL_OK")
</pallas_src>

<mosaic_0001>
module attributes {stable_mosaic.version = 11 : i64} {
  func.func @_linear_kernel(%arg0: i32, %arg1: i32, %arg2: i32, %arg3: memref<16x32xbf16, #tpu.memory_space<vmem>>, %arg4: memref<32x96xbf16, #tpu.memory_space<vmem>>, %arg5: memref<1x96xf32, #tpu.memory_space<vmem>>, %arg6: memref<16x96xbf16, #tpu.memory_space<vmem>>, %arg7: memref<16x96xf32, #tpu.memory_space<vmem>>) attributes {dimension_semantics = [#tpu.dimension_semantics<parallel>, #tpu.dimension_semantics<parallel>, #tpu.dimension_semantics<arbitrary>], iteration_bounds = array<i64: 1, 1, 1>, scalar_prefetch = 0 : i64, scratch_operands = 1 : i64, tpu.core_type = #tpu.core_type<tc>, window_params = [{transform_indices = @transform_0, window_bounds = array<i64: 16, 32>}, {transform_indices = @transform_1, window_bounds = array<i64: 32, 96>}, {transform_indices = @transform_2, window_bounds = array<i64: 1, 96>}, {transform_indices = @transform_3, window_bounds = array<i64: 16, 96>}]} {
    %c0_i32 = arith.constant 0 : i32
    %0 = arith.cmpi eq, %arg2, %c0_i32 : i32
    %1 = arith.extui %0 : i1 to i32
    %c0_i32_0 = arith.constant 0 : i32
    %2 = arith.cmpi ne, %1, %c0_i32_0 : i32
    scf.if %2 {
      %cst_10 = arith.constant 0.000000e+00 : f32
      %12 = vector.broadcast %cst_10 : f32 to vector<16x96xf32>
      %c0_11 = arith.constant 0 : index
      %c0_12 = arith.constant 0 : index
      %13 = vector.load %arg7[%c0_11, %c0_12] : memref<16x96xf32, #tpu.memory_space<vmem>>, vector<16x96xf32>
      tpu.vector_store %arg7[%c0_11, %c0_12], %12 {strides = array<i32>} : memref<16x96xf32, #tpu.memory_space<vmem>>, vector<16x96xf32>,
    } else {
    }
    %c0 = arith.constant 0 : index
    %c0_1 = arith.constant 0 : index
    %3 = vector.load %arg7[%c0, %c0_1] : memref<16x96xf32, #tpu.memory_space<vmem>>, vector<16x96xf32>
    %c0_2 = arith.constant 0 : index
    %c0_3 = arith.constant 0 : index
    %4 = vector.load %arg3[%c0_2, %c0_3] : memref<16x32xbf16, #tpu.memory_space<vmem>>, vector<16x32xbf16>
    %c0_4 = arith.constant 0 : index
    %c0_5 = arith.constant 0 : index
    %5 = vector.load %arg4[%c0_4, %c0_5] : memref<32x96xbf16, #tpu.memory_space<vmem>>, vector<32x96xbf16>
    %cst = arith.constant dense<0.000000e+00> : vector<16x96xf32>
    %6 = tpu.matmul %4, %5, %cst {dimension_numbers = #tpu.dot_dimension_numbers<[1], [0], [0], [1], [0, 0, 1, 1], [], []>} : vector<16x32xbf16>, vector<32x96xbf16>, vector<16x96xf32> -> vector<16x96xf32>
    %7 = arith.addf %3, %6 : vector<16x96xf32>
    %c0_6 = arith.constant 0 : index
    %c0_7 = arith.constant 0 : index
    %8 = vector.load %arg7[%c0_6, %c0_7] : memref<16x96xf32, #tpu.memory_space<vmem>>, vector<16x96xf32>
    tpu.vector_store %arg7[%c0_6, %c0_7], %7 {strides = array<i32>} : memref<16x96xf32, #tpu.memory_space<vmem>>, vector<16x96xf32>,
    %c0_i32_8 = arith.constant 0 : i32
    %9 = arith.cmpi eq, %arg2, %c0_i32_8 : i32
    %10 = arith.extui %9 : i1 to i32
    %c0_i32_9 = arith.constant 0 : i32
    %11 = arith.cmpi ne, %10, %c0_i32_9 : i32
    scf.if %11 {
      %c0_10 = arith.constant 0 : index
      %c0_11 = arith.constant 0 : index
      %12 = vector.load %arg7[%c0_10, %c0_11] : memref<16x96xf32, #tpu.memory_space<vmem>>, vector<16x96xf32>
      %c0_12 = arith.constant 0 : index
      %c0_13 = arith.constant 0 : index
      %13 = vector.load %arg5[%c0_12, %c0_13] : memref<1x96xf32, #tpu.memory_space<vmem>>, vector<1x96xf32>
      %14 = vector.broadcast %13 : vector<1x96xf32> to vector<16x96xf32>
      %15 = arith.addf %12, %14 : vector<16x96xf32>
      %16 = arith.truncf %15 : vector<16x96xf32> to vector<16x96xbf16>
      %c0_14 = arith.constant 0 : index
      %c0_15 = arith.constant 0 : index
      %17 = vector.load %arg6[%c0_14, %c0_15] : memref<16x96xbf16, #tpu.memory_space<vmem>>, vector<16x96xbf16>
      tpu.vector_store %arg6[%c0_14, %c0_15], %16 {strides = array<i32>} : memref<16x96xbf16, #tpu.memory_space<vmem>>, vector<16x96xbf16>,
    } else {
    }
    return
  }
  func.func @transform_0(%arg0: i32, %arg1: i32, %arg2: i32) -> (i32, i32) {
    %c0_i32 = arith.constant 0 : i32
    return %arg0, %arg2 : i32, i32
  }
  func.func @transform_1(%arg0: i32, %arg1: i32, %arg2: i32) -> (i32, i32) {
    %c0_i32 = arith.constant 0 : i32
    return %arg2, %arg1 : i32, i32
  }
  func.func @transform_2(%arg0: i32, %arg1: i32, %arg2: i32) -> (i32, i32) {
    %c0_i32 = arith.constant 0 : i32
    %c0_i32_0 = arith.constant 0 : i32
    return %c0_i32, %arg1 : i32, i32
  }
  func.func @transform_3(%arg0: i32, %arg1: i32, %arg2: i32) -> (i32, i32) {
    %c0_i32 = arith.constant 0 : i32
    return %arg0, %arg1 : i32, i32
  }
}

</mosaic_0001>

<llo_original>
// kernel: tpu_custom_call.1
$region0: #{tpu_custom_call.1}
  #allocation0 [shape = 'u32[]', space=smem, size = 0x4, offset = 0x4, fixed_abs, tag = 'smem constant byte address 0x4 - core index']
  #allocation1 [shape = 'u32[144,128]{1,0:T(1,128)}', space=vmem, size = 0x12000, scoped, tag = 'internal scratch']
  #allocation2 [shape = 'f32[16,96]{1,0:T(8,128)}', space=vmem, size = 0x2000, scoped, tag = 'scratch operand']
  %s0 = inlined_call_operand.hbm [shape: bf16[16,32], index: 0, kind: input, shape index: {}]
  %s1 = inlined_call_operand.hbm [shape: bf16[32,96], index: 1, kind: input, shape index: {}]
  %s2 = inlined_call_operand.vmem [shape: f32[1,96], index: 2, kind: input, shape index: {}]
  %s3 = inlined_call_operand.hbm [shape: bf16[16,96], index: 3, kind: output, shape index: {}]
  %s4 = sld [smem:[#allocation0]]
  $region38: #{tpu_custom_call.1} parent=0
    _
  %s6 = ssub.s32 1, %s4
  %s7 = scalar_select 0, %s6, %s4
  $region1: #{tpu_custom_call.1} parent=0
    #allocation3 [shape = 'u8[4096]{0}', space=vmem, size = 0x1000, scoped, tag = 'input window, operand 0, single buffered']
    #allocation4 [shape = 's32[1]{0}', space=sflag, size = 0x4, scoped, tag = 'scoped memory for tpu_custom_call.1']
    #allocation5 [shape = 's32[1]{0}', space=sflag, size = 0x4, scoped, tag = 'scoped memory for tpu_custom_call.1']
    #allocation6 [shape = 'u8[8192]{0}', space=vmem, size = 0x2000, scoped, tag = 'input window, operand 1, single buffered']
    #allocation7 [shape = 's32[1]{0}', space=sflag, size = 0x4, scoped, tag = 'scoped memory for tpu_custom_call.1']
    #allocation8 [shape = 'u8[4096]{0}', space=vmem, size = 0x1000, scoped, tag = 'output window, operand 0, single buffered']
    %8 = vsyncpa [#allocation4], 0
    %9 = vsyncpa [#allocation7], 0
    %10 = vsyncpa [#allocation5], 0
    // Predicated region
    $region2: #{tpu_custom_call.1} parent=1 // pred_check
      _
    $region3: #{tpu_custom_call.1} parent=1 // pred_check_branch
      %12 = sbr.rel (0) target = $region5
    $region4: #{tpu_custom_call.1} parent=1 // pred_region
      %s14 = ssub.s32 128, 128
      %15 = vsyncadd [#allocation4], %s14
      %s16 = sshll.u32 [#allocation3], 4
      %s17 = int_to_ptr.vmem [resolvable:$true] %s16
      %22 = dma.hbm_to_vmem [thread:$0]  %s0, 128, %s17, [#allocation4], 64, 64, 4
    $region5: #{tpu_custom_call.1} parent=1 // pred_fallthru
      _
    // Predicated region
    $region6: #{tpu_custom_call.1} parent=1 // pred_check
      _
    $region7: #{tpu_custom_call.1} parent=1 // pred_check_branch
      %24 = sbr.rel (0) target = $region9
    $region8: #{tpu_custom_call.1} parent=1 // pred_region
      %s26 = ssub.s32 256, 256
      %27 = vsyncadd [#allocation7], %s26
      %s28 = sshll.u32 [#allocation6], 4
      %s29 = int_to_ptr.vmem [resolvable:$true] %s28
      %34 = dma.hbm_to_vmem [thread:$0]  %s1, 256, %s29, [#allocation7], 64, 64, 4
    $region9: #{tpu_custom_call.1} parent=1 // pred_fallthru
      _
    // Predicated region
    $region10: #{tpu_custom_call.1} parent=1 // pred_check
      _
    $region11: #{tpu_custom_call.1} parent=1 // pred_check_branch
      %36 = sbr.rel (0) target = $region13
    $region12: #{tpu_custom_call.1} parent=1 // pred_region
      _
    $region13: #{tpu_custom_call.1} parent=1 // pred_fallthru
      _
    // Predicated region
    $region14: #{tpu_custom_call.1} parent=1 // pred_check
      _
    $region15: #{tpu_custom_call.1} parent=1 // pred_check_branch
      %38 = sbr.rel (0) target = $region17
    $region16: #{tpu_custom_call.1} parent=1 // pred_region
      %39 = dma.done [#allocation4], 128
    $region17: #{tpu_custom_call.1} parent=1 // pred_fallthru
      _
    // Predicated region
    $region18: #{tpu_custom_call.1} parent=1 // pred_check
      _
    $region19: #{tpu_custom_call.1} parent=1 // pred_check_branch
      %41 = sbr.rel (0) target = $region21
    $region20: #{tpu_custom_call.1} parent=1 // pred_region
      %42 = dma.done [#allocation7], 256
    $region21: #{tpu_custom_call.1} parent=1 // pred_fallthru
      _
    %p44 = scmp.eq.s32.totalorder 0, 0
    // Predicated region
    $region22: #{tpu_custom_call.1} parent=1 // pred_check
      %p45 = pneg %p44
    $region23: #{tpu_custom_call.1} parent=1 // pred_check_branch
      %47 = sbr.rel (%p45) target = $region25
    $region24: #{tpu_custom_call.1} parent=1 // pred_region
      %vm48 = vcmask 785408
      %49 = vst.msk [vmem:[#allocation2] sm:$0xff] %vm48, 0.0
      %50 = vst.msk [vmem:[#allocation2 + $0x8] sm:$0xff] %vm48, 0.0
    $region25: #{tpu_custom_call.1} parent=1 // pred_fallthru
      _
    %v51 = vld [vmem:[#allocation2] sm:$0xff]
    %v52 = vld [vmem:[#allocation2 + $0x8] sm:$0xff]
    %v53 = vld [vmem:[#allocation3] sm:$0xf]
    %v54 = vld [vmem:[#allocation3 + $0x4] sm:$0xf]
    %v55 = vld [vmem:[#allocation6] sm:$0xf]
    %v56 = vld [vmem:[#allocation6 + $0x4] sm:$0xf]
    %v57 = vld [vmem:[#allocation6 + $0x8] sm:$0xf]
    %v58 = vld [vmem:[#allocation6 + $0xc] sm:$0xf]
    %v61 = vunpack.c.l.b16 %v53
    %v62 = vunpack.c.l.b16 %v54
    %v63 = vpack.c.b16 %v62, %v61
    %v68 = vunpack.c.l.b16 %v55
    %v69 = vunpack.c.l.b16 %v56
    %v70 = vunpack.c.l.b16 %v57
    %v71 = vunpack.c.l.b16 %v58
    %v72 = vpack.c.b16 %v69, %v68
    %v73 = vpack.c.b16 %v71, %v70
    %vm76 = vcmask 261120
    %v78 = vsel %vm76, %v63, 0
    %80 = vmatprep.subr.bf16.mxu0 0
    %81 = vmatpush1.bf16.msra.mxu0 0
    %82 = vmatprep.subr.bf16.mxu0 0
    %83 = vmatpush1.bf16.msra.mxu0 0
    %84 = vmatprep.subr.bf16.mxu0 0
    %85 = vmatpush1.bf16.msra.mxu0 0
    %86 = vmatprep.subr.bf16.mxu0 0
    %87 = vmatpush1.bf16.msra.mxu0 0
    %88 = vmatprep.subr.bf16.mxu0 0
    %89 = vmatpush1.bf16.msra.mxu0 0
    %90 = vmatprep.subr.bf16.mxu0 0
    %91 = vmatpush1.bf16.msra.mxu0 0
    %92 = vmatprep.subr.bf16.mxu0 0
    %93 = vmatpush1.bf16.msra.mxu0 %v73
    %94 = vmatprep.subr.bf16.mxu0 0
    %95 = vmatpush1.bf16.msra.mxu0 %v72
    %96 = vmatprep.subr.bf16.mxu0 0
    %97 = vmatpush2.bf16.msra.mxu0 0
    %98 = vmatprep.subr.bf16.mxu0 0
    %99 = vmatpush2.bf16.msra.mxu0 0
    %100 = vmatprep.subr.bf16.mxu0 0
    %101 = vmatpush2.bf16.msra.mxu0 0
    %102 = vmatprep.subr.bf16.mxu0 0
    %103 = vmatpush2.bf16.msra.mxu0 0
    %104 = vmatprep.subr.bf16.mxu0 0
    %105 = vmatpush2.bf16.msra.mxu0 0
    %106 = vmatprep.subr.bf16.mxu0 0
    %107 = vmatpush2.bf16.msra.mxu0 0
    %108 = vmatprep.subr.bf16.mxu0 0
    %109 = vmatpush2.bf16.msra.mxu0 0
    %110 = vmatprep.subr.bf16.mxu0 0
    %111 = vmatpush2.bf16.msra.mxu0 0
    %112 = vmatprep.mubr.bf16.mxu0 0
    %113 = vmatmul.mubr.bf16.gmra.mxu0 %v78
    %v114 = vpop.f32.mrf.mxu0
    %v115 = vadd.f32 0.0, %v114
    %v116 = vpop.f32.mrf.mxu0
    %v117 = vpop.f32.mrf.mxu0
    %v118 = vadd.f32 0.0, %v117
    %v119 = vpop.f32.mrf.mxu0
    %120 = vdwg.mxu0
    %v121 = vadd.f32 %v51, %v115
    %v122 = vadd.f32 %v52, %v118
    %vm123 = vcmask 785408
    %124 = vst.msk [vmem:[#allocation2] sm:$0xff] %vm123, %v121
    %125 = vst.msk [vmem:[#allocation2 + $0x8] sm:$0xff] %vm123, %v122
    // Predicated region
    $region26: #{tpu_custom_call.1} parent=1 // pred_check
      %p126 = pneg %p44
    $region27: #{tpu_custom_call.1} parent=1 // pred_check_branch
      %128 = sbr.rel (%p126) target = $region29
    $region28: #{tpu_custom_call.1} parent=1 // pred_region
      %v129 = vld [vmem:[#allocation2] sm:$0xff]
      %v130 = vld [vmem:[#allocation2 + $0x8] sm:$0xff]
      %v131 = vld [vmem:[%s2] sm:$0x1]
      %v133 = vlaneseq
      %v134 = vshrl.u32 %v133, 7
      %v135 = vsub.s32 0, %v134
      %v136 = vrot.slane %v131, %v135
      %v138 = vadd.f32 %v129, %v136
      %v139 = vadd.f32 %v130, %v136
      %v140 = vpack.c.bf16 %v139, %v138
      %v142 = vunpack.c.l.b16 %v140
      %v143 = vunpack.c.h.b16 %v140
      %v144 = vpack.c.b16 %v142, %v142
      %v145 = vpack.c.b16 %v143, %v143
      %vm148 = vcmask 781312
      %149 = vst.msk [vmem:[#allocation8] sm:$0xf] %vm148, %v144
      %150 = vst.msk [vmem:[#allocation8 + $0x4] sm:$0xf] %vm148, %v145
    $region29: #{tpu_custom_call.1} parent=1 // pred_fallthru
      _
    // Predicated region
    $region30: #{tpu_custom_call.1} parent=1 // pred_check
      _
    $region31: #{tpu_custom_call.1} parent=1 // pred_check_branch
      %152 = sbr.rel (0) target = $region33
    $region32: #{tpu_custom_call.1} parent=1 // pred_region
      %s154 = ssub.s32 128, 128
      %155 = vsyncadd [#allocation5], %s154
      %s156 = sshll.u32 [#allocation8], 4
      %s157 = int_to_ptr.vmem [resolvable:$true] %s156
      %162 = dma.vmem_to_hbm [thread:$0]  %s157, 128, %s3, [#allocation5], 64, 64, 4
    $region33: #{tpu_custom_call.1} parent=1 // pred_fallthru
      _
    // Predicated region
    $region34: #{tpu_custom_call.1} parent=1 // pred_check
      _
    $region35: #{tpu_custom_call.1} parent=1 // pred_check_branch
      %164 = sbr.rel (0) target = $region37
    $region36: #{tpu_custom_call.1} parent=1 // pred_region
      %165 = dma.done [#allocation5], 128
    $region37: #{tpu_custom_call.1} parent=1 // pred_fallthru
      _
    %166 = vsyncpa [#allocation4], 1
    %167 = vsyncpa [#allocation7], 1
    %168 = vsyncpa [#allocation5], 1

</llo_original>
